<compile_context>
chip_gen: v6e
topology: v6e:2x2x1
jax: 0.10.0
libtpu: 0.0.40
codegen_flags: <defaults>
</compile_context>

<pallas_src>
import functools

import jax
import jax.numpy as jnp
from jax.experimental import pallas as pl
from jax.experimental.pallas import tpu as pltpu


def _layernorm_kernel(x_ref, g_ref, b_ref, o_ref, *, eps):
    # x_ref: (TILE_D, seq) tile; g_ref/b_ref: (TILE_D, 1)
    x = x_ref[...].astype(jnp.float32)
    seq = x.shape[-1]

    mean = jnp.mean(x, axis=-1, keepdims=True)                       # (TILE_D, 1)
    # Unbiased variance (torch.var default): divide by (N - 1).
    var = jnp.sum(jnp.square(x - mean), axis=-1, keepdims=True) * (1.0 / (seq - 1))

    gain = g_ref[...].astype(jnp.float32)                            # (TILE_D, 1)
    bias = b_ref[...].astype(jnp.float32)                            # (TILE_D, 1)

    # Per-row scale/shift (hoisted once per tile); rsqrt goes to the EUP slot.
    scale = jax.lax.rsqrt(var + eps) * gain                          # (TILE_D, 1)
    shift = bias - mean * scale                                      # (TILE_D, 1)

    o_ref[...] = (x * scale + shift).astype(o_ref.dtype)


def _choose_tile_d(d_model, seq, itemsize, max_block_bytes):
    """Largest row-tile (multiple of 8 if tiling) that divides d_model and fits."""
    max_rows = max(1, max_block_bytes // (seq * itemsize))
    if d_model <= max_rows:
        return d_model
    cand = (max_rows // 8) * 8
    while cand >= 8:
        if d_model % cand == 0:
            return cand
        cand -= 8
    # No clean multiple-of-8 divisor fits; fall back to the full slab rather
    # than producing masked/partial sublane layouts.
    return d_model


def layernorm(x, gain, bias, eps=1e-5, *, max_block_bytes=4 * 1024 * 1024):
    """x: (batch, d_model, seq); gain/bias: (d_model, 1)."""
    batch, d_model, seq = x.shape
    assert seq > 1, "unbiased variance (N-1 divisor) undefined for seq == 1"
    assert gain.shape == (d_model, 1) and bias.shape == (d_model, 1)

    itemsize = jnp.dtype(x.dtype).itemsize
    tile_d = _choose_tile_d(d_model, seq, itemsize, max_block_bytes)
    grid = (batch, d_model // tile_d)

    kernel = functools.partial(_layernorm_kernel, eps=eps)

    x_spec = pl.BlockSpec((pl.Squeezed(), tile_d, seq), lambda b, j: (b, j, 0))
    out_spec = pl.BlockSpec((pl.Squeezed(), tile_d, seq), lambda b, j: (b, j, 0))
    g_spec = pl.BlockSpec((tile_d, 1), lambda b, j: (j, 0))
    b_spec = pl.BlockSpec((tile_d, 1), lambda b, j: (j, 0))

    return pl.pallas_call(
        kernel,
        out_shape=jax.ShapeDtypeStruct((batch, d_model, seq), x.dtype),
        grid_spec=pltpu.PrefetchScalarGridSpec(
            num_scalar_prefetch=0,
            grid=grid,
            in_specs=[x_spec, g_spec, b_spec],
            out_specs=out_spec,
        ),
        compiler_params=pltpu.CompilerParams(
            # Both axes fully independent -> shard across TCs on v7x.
            dimension_semantics=("parallel", "parallel"),
            # Explicit scoped-VMEM budget: headroom under v7x's 64 MiB physical,
            # above the 32 MiB default so large lane-dense tiles still pipeline.
            vmem_limit_bytes=48 * 1024 * 1024,
        ),
    )(x, gain, bias)


if __name__ == "__main__":
    batch, d_model, seq = 2, 8, 128
    key = jax.random.PRNGKey(0)
    x = jax.random.normal(key, (batch, d_model, seq), dtype=jnp.float32)

    # Deterministic parameter init, matching the module's __init__:
    gain = jnp.ones((d_model, 1), dtype=jnp.float32)
    bias = jnp.zeros((d_model, 1), dtype=jnp.float32)

    out = layernorm(x, gain, bias, eps=1e-5)
    jax.block_until_ready(out)

    # Reference in plain JAX (same unbiased-variance semantics as torch.var).
    mean = jnp.mean(x, axis=-1, keepdims=True)
    var = jnp.sum((x - mean) ** 2, axis=-1, keepdims=True) / (seq - 1)
    ref = (x - mean) / jnp.sqrt(var + 1e-5) * gain + bias
    assert jnp.allclose(out, ref, atol=1e-5, rtol=1e-5)

    print("KERNEL_OK")
</pallas_src>

<mosaic_0001>
module attributes {stable_mosaic.version = 11 : i64} {
  func.func @_layernorm_kernel(%arg0: i32, %arg1: i32, %arg2: memref<1x8x128xf32, #tpu.memory_space<vmem>>, %arg3: memref<8x1xf32, #tpu.memory_space<vmem>>, %arg4: memref<8x1xf32, #tpu.memory_space<vmem>>, %arg5: memref<1x8x128xf32, #tpu.memory_space<vmem>>) attributes {dimension_semantics = [#tpu.dimension_semantics<parallel>, #tpu.dimension_semantics<parallel>], iteration_bounds = array<i64: 2, 1>, scalar_prefetch = 0 : i64, scratch_operands = 0 : i64, tpu.core_type = #tpu.core_type<tc>, window_params = [{transform_indices = @transform_0, window_bounds = array<i64: 1, 8, 128>}, {transform_indices = @transform_1, window_bounds = array<i64: 8, 1>}, {transform_indices = @transform_2, window_bounds = array<i64: 8, 1>}, {transform_indices = @transform_3, window_bounds = array<i64: 1, 8, 128>}]} {
    %c0 = arith.constant 0 : index
    %c0_0 = arith.constant 0 : index
    %c0_1 = arith.constant 0 : index
    %0 = vector.load %arg2[%c0, %c0_0, %c0_1] : memref<1x8x128xf32, #tpu.memory_space<vmem>>, vector<1x8x128xf32>
    %1 = vector.shape_cast %0 : vector<1x8x128xf32> to vector<8x128xf32>
    %cst = arith.constant dense<0.000000e+00> : vector<8xf32>
    %2 = vector.multi_reduction <add>, %1, %cst [1] : vector<8x128xf32> to vector<8xf32>
    %3 = vector.shape_cast %2 : vector<8xf32> to vector<8x1xf32>
    %cst_2 = arith.constant 1.280000e+02 : f32
    %4 = vector.broadcast %cst_2 : f32 to vector<8x1xf32>
    %5 = arith.divf %3, %4 : vector<8x1xf32>
    %6 = vector.broadcast %5 : vector<8x1xf32> to vector<8x128xf32>
    %7 = arith.subf %1, %6 : vector<8x128xf32>
    %8 = arith.mulf %7, %7 : vector<8x128xf32>
    %cst_3 = arith.constant dense<0.000000e+00> : vector<8xf32>
    %9 = vector.multi_reduction <add>, %8, %cst_3 [1] : vector<8x128xf32> to vector<8xf32>
    %10 = vector.shape_cast %9 : vector<8xf32> to vector<8x1xf32>
    %cst_4 = arith.constant 0.00787401571 : f32
    %11 = vector.broadcast %cst_4 : f32 to vector<8x1xf32>
    %12 = arith.mulf %10, %11 : vector<8x1xf32>
    %c0_5 = arith.constant 0 : index
    %c0_6 = arith.constant 0 : index
    %13 = vector.load %arg3[%c0_5, %c0_6] : memref<8x1xf32, #tpu.memory_space<vmem>>, vector<8x1xf32>
    %c0_7 = arith.constant 0 : index
    %c0_8 = arith.constant 0 : index
    %14 = vector.load %arg4[%c0_7, %c0_8] : memref<8x1xf32, #tpu.memory_space<vmem>>, vector<8x1xf32>
    %cst_9 = arith.constant 9.99999974E-6 : f32
    %15 = vector.broadcast %cst_9 : f32 to vector<8x1xf32>
    %16 = arith.addf %12, %15 : vector<8x1xf32>
    %17 = math.rsqrt %16 : vector<8x1xf32>
    %18 = arith.mulf %17, %13 : vector<8x1xf32>
    %19 = arith.mulf %5, %18 : vector<8x1xf32>
    %20 = arith.subf %14, %19 : vector<8x1xf32>
    %21 = vector.broadcast %18 : vector<8x1xf32> to vector<8x128xf32>
    %22 = arith.mulf %1, %21 : vector<8x128xf32>
    %23 = vector.broadcast %20 : vector<8x1xf32> to vector<8x128xf32>
    %24 = arith.addf %22, %23 : vector<8x128xf32>
    %c0_10 = arith.constant 0 : index
    %c0_11 = arith.constant 0 : index
    %c0_12 = arith.constant 0 : index
    %25 = vector.load %arg5[%c0_10, %c0_11, %c0_12] : memref<1x8x128xf32, #tpu.memory_space<vmem>>, vector<1x8x128xf32>
    %26 = vector.shape_cast %25 : vector<1x8x128xf32> to vector<8x128xf32>
    %27 = vector.shape_cast %24 : vector<8x128xf32> to vector<1x8x128xf32>
    tpu.vector_store %arg5[%c0_10, %c0_11, %c0_12], %27 {strides = array<i32>} : memref<1x8x128xf32, #tpu.memory_space<vmem>>, vector<1x8x128xf32>,
    return
  }
  func.func @transform_0(%arg0: i32, %arg1: i32) -> (i32, i32, i32) {
    %c0_i32 = arith.constant 0 : i32
    %c0_i32_0 = arith.constant 0 : i32
    return %arg0, %arg1, %c0_i32 : i32, i32, i32
  }
  func.func @transform_1(%arg0: i32, %arg1: i32) -> (i32, i32) {
    %c0_i32 = arith.constant 0 : i32
    %c0_i32_0 = arith.constant 0 : i32
    return %arg1, %c0_i32 : i32, i32
  }
  func.func @transform_2(%arg0: i32, %arg1: i32) -> (i32, i32) {
    %c0_i32 = arith.constant 0 : i32
    %c0_i32_0 = arith.constant 0 : i32
    return %arg1, %c0_i32 : i32, i32
  }
  func.func @transform_3(%arg0: i32, %arg1: i32) -> (i32, i32, i32) {
    %c0_i32 = arith.constant 0 : i32
    %c0_i32_0 = arith.constant 0 : i32
    return %arg0, %arg1, %c0_i32 : i32, i32, i32
  }
}

</mosaic_0001>

<llo_original>
// kernel: tpu_custom_call.1
$region0: #{tpu_custom_call.1}
  #allocation0 [shape = 'u32[]', space=smem, size = 0x4, offset = 0x4, fixed_abs, tag = 'smem constant byte address 0x4 - core index']
  #allocation1 [shape = 'u32[144,128]{1,0:T(1,128)}', space=vmem, size = 0x12000, scoped, tag = 'internal scratch']
  %s0 = inlined_call_operand.vmem [shape: f32[2,8,128], index: 0, kind: input, shape index: {}]
  %s1 = inlined_call_operand.vmem [shape: f32[8,1], index: 1, kind: input, shape index: {}]
  %s2 = inlined_call_operand.vmem [shape: f32[8,1], index: 2, kind: input, shape index: {}]
  %s3 = inlined_call_operand.hbm [shape: f32[2,8,128], index: 3, kind: output, shape index: {}]
  %s4 = sld [smem:[#allocation0]]
  $region45: #{tpu_custom_call.1} parent=0
    _
  %s6 = ssub.s32 1, %s4
  %s7 = scalar_select 0, %s6, %s4
  $region1: #{tpu_custom_call.1} parent=0
    #allocation2 [shape = 'u8[8192]{0}', space=vmem, size = 0x2000, scoped, tag = 'output window, operand 0']
    #allocation3 [shape = 's32[2]{0}', space=sflag, size = 0x8, scoped, tag = 'scoped memory for tpu_custom_call.1']
    %8 = vsyncpa [#allocation3], 0
    %s9 = scalar_lea.sflag [#allocation3], 1
    %10 = vsyncpa %s9, 0
    loop: start=0, step=1, limit=4
    $region2: #{tpu_custom_call.1} parent=1 // loop_pre_header
      _
    $region3: #{tpu_custom_call.1} parent=1 // loop_header
      %s12 = sphi 0, %s16
      %p13 = scmp.ge.s32.totalorder %s12, 4
      %s19 = sphi 0, %s31
      %s20 = sphi 0, %s27
      %s21 = sphi 0, %s19
      %s22 = sphi 0, %s20
      %s23 = sphi 0, %s21
      %s24 = sphi 0, %s22
      %s36 = sphi 0, %s38
      %s39 = sphi 0, %s36
      %s40 = sphi 0, %s39
      %s56 = sphi 0, %s40
      %s62 = sphi 0, %s64
      %s65 = sphi 0, %s62
      %s66 = sphi 0, %s65
      %s82 = sphi 0, %s66
      %s88 = sphi 0, %s90
      %s91 = sphi 0, %s88
      %s92 = sphi 0, %s91
      %s108 = sphi 0, %s92
      %s116 = sphi 0, %s118
      %s119 = sphi 0, %s116
      %s120 = sphi 0, %s119
      %s136 = sphi 0, %s120
    $region4: #{tpu_custom_call.1} parent=1 // loop_header_branch
      %15 = sbr.rel (%p13) target = $region8
    $region5: #{tpu_custom_call.1} parent=1 // loop_body
      %s17 = ssub.s32 %s12, 1
      %s18 = ssub.s32 %s12, 2
      %s25 = sadd.s32 1, %s20
      %p26 = scmp.ge.s32.totalorder %s25, 1
      %s27 = scalar_select %p26, 0, %s25
      %s28 = sadd.s32 1, %s19
      %s29 = scalar_select %p26, %s28, %s19
      %p30 = scmp.ge.s32.totalorder %s29, 2
      %s31 = scalar_select %p30, 0, %s29
      %s32 = ssub.s32 %s19, %s31
      %s33 = ssub.s32 %s20, %s27
      %s34 = sor.u32 %s32, %s33
      %p35 = scmp.eq.s32.totalorder %s34, 0
      %s37 = sadd.s32 %s36, 1
      %s38 = scalar_select %p35, %s36, %s37
      %p41 = pneg %p35
      %p42 = scmp.eq.s32.totalorder %s12, 1
      %p43 = por %p41, %p42
      %p44 = scmp.ne.s32.totalorder %s36, %s39
      %p45 = scmp.eq.s32.totalorder %s12, 0
      %p46 = por %p44, %p45
      %p47 = scmp.ne.s32.totalorder %s36, %s39
      %p48 = scmp.eq.s32.totalorder %s17, 1
      %p49 = por %p47, %p48
      %p50 = scmp.ne.s32.totalorder %s39, %s40
      %p51 = scmp.eq.s32.totalorder %s17, 0
      %p52 = por %p50, %p51
      %p53 = scmp.ne.s32.totalorder %s39, %s40
      %p54 = scmp.eq.s32.totalorder %s18, 1
      %p55 = por %p53, %p54
      %p57 = scmp.ne.s32.totalorder %s40, %s56
      %p58 = scmp.eq.s32.totalorder %s18, 0
      %p59 = por %p57, %p58
      %s60 = ssub.s32 %s20, %s27
      %p61 = scmp.eq.s32.totalorder %s60, 0
      %s63 = sadd.s32 %s62, 1
      %s64 = scalar_select %p61, %s62, %s63
      %p67 = pneg %p61
      %p68 = scmp.eq.s32.totalorder %s12, 1
      %p69 = por %p67, %p68
      %p70 = scmp.ne.s32.totalorder %s62, %s65
      %p71 = scmp.eq.s32.totalorder %s12, 0
      %p72 = por %p70, %p71
      %p73 = scmp.ne.s32.totalorder %s62, %s65
      %p74 = scmp.eq.s32.totalorder %s17, 1
      %p75 = por %p73, %p74
      %p76 = scmp.ne.s32.totalorder %s65, %s66
      %p77 = scmp.eq.s32.totalorder %s17, 0
      %p78 = por %p76, %p77
      %p79 = scmp.ne.s32.totalorder %s65, %s66
      %p80 = scmp.eq.s32.totalorder %s18, 1
      %p81 = por %p79, %p80
      %p83 = scmp.ne.s32.totalorder %s66, %s82
      %p84 = scmp.eq.s32.totalorder %s18, 0
      %p85 = por %p83, %p84
      %s86 = ssub.s32 %s20, %s27
      %p87 = scmp.eq.s32.totalorder %s86, 0
      %s89 = sadd.s32 %s88, 1
      %s90 = scalar_select %p87, %s88, %s89
      %p93 = pneg %p87
      %p94 = scmp.eq.s32.totalorder %s12, 1
      %p95 = por %p93, %p94
      %p96 = scmp.ne.s32.totalorder %s88, %s91
      %p97 = scmp.eq.s32.totalorder %s12, 0
      %p98 = por %p96, %p97
      %p99 = scmp.ne.s32.totalorder %s88, %s91
      %p100 = scmp.eq.s32.totalorder %s17, 1
      %p101 = por %p99, %p100
      %p102 = scmp.ne.s32.totalorder %s91, %s92
      %p103 = scmp.eq.s32.totalorder %s17, 0
      %p104 = por %p102, %p103
      %p105 = scmp.ne.s32.totalorder %s91, %s92
      %p106 = scmp.eq.s32.totalorder %s18, 1
      %p107 = por %p105, %p106
      %p109 = scmp.ne.s32.totalorder %s92, %s108
      %p110 = scmp.eq.s32.totalorder %s18, 0
      %p111 = por %p109, %p110
      %s112 = ssub.s32 %s19, %s31
      %s113 = ssub.s32 %s20, %s27
      %s114 = sor.u32 %s112, %s113
      %p115 = scmp.eq.s32.totalorder %s114, 0
      %s117 = sadd.s32 %s116, 1
      %s118 = scalar_select %p115, %s116, %s117
      %p121 = pneg %p115
      %p122 = scmp.eq.s32.totalorder %s12, 1
      %p123 = por %p121, %p122
      %p124 = scmp.ne.s32.totalorder %s116, %s119
      %p125 = scmp.eq.s32.totalorder %s12, 0
      %p126 = por %p124, %p125
      %p127 = scmp.ne.s32.totalorder %s116, %s119
      %p128 = scmp.eq.s32.totalorder %s17, 1
      %p129 = por %p127, %p128
      %p130 = scmp.ne.s32.totalorder %s119, %s120
      %p131 = scmp.eq.s32.totalorder %s17, 0
      %p132 = por %p130, %p131
      %p133 = scmp.ne.s32.totalorder %s119, %s120
      %p134 = scmp.eq.s32.totalorder %s18, 1
      %p135 = por %p133, %p134
      %p137 = scmp.ne.s32.totalorder %s120, %s136
      %p138 = scmp.eq.s32.totalorder %s18, 0
      %p139 = por %p137, %p138
      %p140 = scmp.le.s32.totalorder 1, %s12
      %p141 = scmp.lt.s32.totalorder %s12, 3
      %p142 = pnand %p140, %p141
      %p143 = pneg %p142
      // Predicated region
      $region9: #{tpu_custom_call.1} parent=5 // pred_check
        _
      $region10: #{tpu_custom_call.1} parent=5 // pred_check_branch
        %145 = sbr.rel (%p142) target = $region12
      $region11: #{tpu_custom_call.1} parent=5 // pred_region
        %s146 = ssub.s32 %s12, 1
        // Predicated region
        $region13: #{tpu_custom_call.1} parent=11 // pred_check
          %p147 = pneg %p78
        $region14: #{tpu_custom_call.1} parent=11 // pred_check_branch
          %149 = sbr.rel (%p147) target = $region16
        $region15: #{tpu_custom_call.1} parent=11 // pred_region
          %p150 = scmp.lt.s32.totalorder %s22, 0
          %s151 = scalar_select %p150, %s22, 0
          %s152 = smul.addr %s151, 8
          %s153 = scalar_lea.vmem %s1, %s152
        $region16: #{tpu_custom_call.1} parent=11 // pred_fallthru
          _
        // Predicated region
        $region17: #{tpu_custom_call.1} parent=11 // pred_check
          %p154 = pneg %p104
        $region18: #{tpu_custom_call.1} parent=11 // pred_check_branch
          %156 = sbr.rel (%p154) target = $region20
        $region19: #{tpu_custom_call.1} parent=11 // pred_region
          %p157 = scmp.lt.s32.totalorder %s22, 0
          %s158 = scalar_select %p157, %s22, 0
          %s159 = smul.addr %s158, 8
          %s160 = scalar_lea.vmem %s2, %s159
        $region20: #{tpu_custom_call.1} parent=11 // pred_fallthru
          _
      $region12: #{tpu_custom_call.1} parent=5 // pred_fallthru
        _
      %p161 = scmp.lt.s32.totalorder %s12, 2
      // Predicated region
      $region21: #{tpu_custom_call.1} parent=5 // pred_check
        %p162 = pneg %p161
      $region22: #{tpu_custom_call.1} parent=5 // pred_check_branch
        %164 = sbr.rel (%p162) target = $region24
      $region23: #{tpu_custom_call.1} parent=5 // pred_region
        // Predicated region
        $region25: #{tpu_custom_call.1} parent=23 // pred_check
          %p165 = pneg %p46
        $region26: #{tpu_custom_call.1} parent=23 // pred_check_branch
          %167 = sbr.rel (%p165) target = $region28
        $region27: #{tpu_custom_call.1} parent=23 // pred_region
          %p168 = scmp.lt.s32.totalorder %s19, 1
          %s169 = scalar_select %p168, %s19, 1
          %p170 = scmp.lt.s32.totalorder %s20, 0
          %s171 = scalar_select %p170, %s20, 0
          %s172 = sadd.s32 %s171, %s169
          %s173 = smul.addr %s172, 8
          %s174 = scalar_lea.vmem %s0, %s173
        $region28: #{tpu_custom_call.1} parent=23 // pred_fallthru
          _
      $region24: #{tpu_custom_call.1} parent=5 // pred_fallthru
        _
      %p175 = scmp.le.s32.totalorder 1, %s12
      %p176 = scmp.lt.s32.totalorder %s12, 3
      %p177 = pnand %p175, %p176
      %p178 = pneg %p177
      // Predicated region
      $region29: #{tpu_custom_call.1} parent=5 // pred_check
        _
      $region30: #{tpu_custom_call.1} parent=5 // pred_check_branch
        %180 = sbr.rel (%p177) target = $region32
      $region31: #{tpu_custom_call.1} parent=5 // pred_region
        %s181 = ssub.s32 %s12, 1
        %p182 = scmp.lt.s32.totalorder %s21, 1
        %s183 = scalar_select %p182, %s21, 1
        %p184 = scmp.lt.s32.totalorder %s22, 0
        %s185 = scalar_select %p184, %s22, 0
        %s186 = sadd.s32 %s185, %s183
        %s187 = smul.addr %s186, 8
        %s188 = scalar_lea.vmem %s0, %s187
        %p189 = pneg %p52
        %p190 = pneg %p49
        %p191 = scmp.lt.s32.totalorder %s22, 0
        %s192 = scalar_select %p191, %s22, 0
        %s193 = smul.addr %s192, 8
        %s194 = scalar_lea.vmem %s1, %s193
        %p195 = pneg %p78
        %p196 = pneg %p75
        %p197 = scmp.lt.s32.totalorder %s22, 0
        %s198 = scalar_select %p197, %s22, 0
        %s199 = smul.addr %s198, 8
        %s200 = scalar_lea.vmem %s2, %s199
        %p201 = pneg %p104
        %p202 = pneg %p101
        %p203 = pneg %p132
        %p204 = pneg %p129
        %s205 = sand.u32 %s119, 1
        %s206 = scalar_lea.sflag [#allocation3], %s205
        %s207 = sand.u32 %s119, 1
        %s208 = smul.addr %s207, 8
        %s209 = scalar_lea.vmem [#allocation2], %s208
        %p210 = scmp.lt.s32.totalorder %s21, 1
        %s211 = scalar_select %p210, %s21, 1
        %p212 = scmp.lt.s32.totalorder %s22, 0
        %s213 = scalar_select %p212, %s22, 0
        %s214 = sadd.s32 %s213, %s211
        %s215 = smul.addr %s214, 8
        %s216 = scalar_lea.vmem %s0, %s215
        %p217 = scmp.lt.s32.totalorder %s22, 0
        %s218 = scalar_select %p217, %s22, 0
        %s219 = smul.addr %s218, 8
        %s220 = scalar_lea.vmem %s1, %s219
        %p221 = scmp.lt.s32.totalorder %s22, 0
        %s222 = scalar_select %p221, %s22, 0
        %s223 = smul.addr %s222, 8
        %s224 = scalar_lea.vmem %s2, %s223
        %v225 = vld [vmem:[%s216] sm:$0xff]
        %226 = vadd.xlane.f32.xlu0 %v225
        %v227 = vpop.xlane.xlu0 %226
        %v228 = vrcp.pop 128.0
        %v229 = vmul.f32 %v227, %v228
        %v230 = vsub.f32 %v225, %v229
        %v231 = vmul.f32 %v230, %v230
        %232 = vadd.xlane.f32.xlu0 %v231
        %v233 = vpop.xlane.xlu0 %232
        %v234 = vmul.f32 %v233, 0.007874016
        %v235 = vld [vmem:[%s220] sm:$0xff]
        %v236 = vld [vmem:[%s224] sm:$0xff]
        %v237 = vadd.f32 %v234, 1e-05
        %v238 = vrsqrt.pop %v237
        %v239 = vmul.f32 %v238, %v235
        %v240 = vmul.f32 %v229, %v239
        %v241 = vsub.f32 %v236, %v240
        %243 = vset.pattern.permute.xlu0 0
        %244 = vperm.xlu0 %243, %v239
        %v245 = vpop.permute.xlu0 %244
        %v247 = vmul.f32 %v225, %v245
        %249 = vset.pattern.permute.xlu0 0
        %250 = vperm.xlu0 %249, %v241
        %v251 = vpop.permute.xlu0 %250
        %v253 = vadd.f32 %v247, %v251
        %254 = vst [vmem:[%s209] sm:$0xff] %v253
        %s255 = sand.u32 %s119, 1
        %s256 = scalar_lea.sflag [#allocation3], %s255
        %s257 = sand.u32 %s119, 1
        %s258 = smul.addr %s257, 8
        %s259 = scalar_lea.vmem [#allocation2], %s258
        // Predicated region
        $region33: #{tpu_custom_call.1} parent=31 // pred_check
          %p260 = pneg %p129
        $region34: #{tpu_custom_call.1} parent=31 // pred_check_branch
          %262 = sbr.rel (%p260) target = $region36
        $region35: #{tpu_custom_call.1} parent=31 // pred_region
          %s264 = ssub.s32 128, 128
          %265 = vsyncadd %s256, %s264
          %s266 = sadd.s32 %s22, %s21
          %s267 = smul.addr %s266, 128
          %s268 = scalar_lea.hbm %s3, %s267
          %s270 = sshll.u32 %s259, 4
          %s271 = int_to_ptr.vmem [resolvable:$true] %s270
          %273 = dma.vmem_to_hbm [thread:$0]  %s271, 128, %s268, %s256
        $region36: #{tpu_custom_call.1} parent=31 // pred_fallthru
          _
      $region32: #{tpu_custom_call.1} parent=5 // pred_fallthru
        _
      %p274 = scmp.le.s32.totalorder 2, %s12
      // Predicated region
      $region37: #{tpu_custom_call.1} parent=5 // pred_check
        %p275 = pneg %p274
      $region38: #{tpu_custom_call.1} parent=5 // pred_check_branch
        %277 = sbr.rel (%p275) target = $region40
      $region39: #{tpu_custom_call.1} parent=5 // pred_region
        %s278 = ssub.s32 %s12, 2
        // Predicated region
        $region41: #{tpu_custom_call.1} parent=39 // pred_check
          %p279 = pneg %p135
        $region42: #{tpu_custom_call.1} parent=39 // pred_check_branch
          %281 = sbr.rel (%p279) target = $region44
        $region43: #{tpu_custom_call.1} parent=39 // pred_region
          %s282 = sand.u32 %s120, 1
          %s283 = scalar_lea.sflag [#allocation3], %s282
          %s284 = sand.u32 %s120, 1
          %s285 = smul.addr %s284, 8
          %s286 = scalar_lea.vmem [#allocation2], %s285
          %287 = dma.done %s283, 128
        $region44: #{tpu_custom_call.1} parent=39 // pred_fallthru
          _
      $region40: #{tpu_custom_call.1} parent=5 // pred_fallthru
        _
    $region6: #{tpu_custom_call.1} parent=1 // loop_footer
      %s16 = sadd.s32 1, %s12
    $region7: #{tpu_custom_call.1} parent=1 // loop_footer_branch
      %11 = sbr.rel target = $region3
    $region8: #{tpu_custom_call.1} parent=1 // loop_exit
      _
    %288 = vsyncpa [#allocation3], 1
    %s289 = scalar_lea.sflag [#allocation3], 1
    %290 = vsyncpa %s289, 1

</llo_original>
